<compile_context>
chip_gen: v6e
topology: v6e:2x2x1
jax: 0.10.0
libtpu: 0.0.40
codegen_flags: <defaults>
</compile_context>

<pallas_src>
import jax
import jax.numpy as jnp
from jax import lax
from jax.experimental import pallas as pl
from jax.experimental.pallas import tpu as pltpu

_LANES = 128
_MAX_BLOCK_ROWS = 4096                    # (4096, 128) f32 block = 2 MiB per stream
_VMEM_LIMIT_BYTES = 40 * 1024 * 1024      # fits v7x (64 MiB phys) with headroom


def _num_tensorcores():
    """Best-effort TensorCore-per-device count (megacore / v7x detection)."""
    try:
        kind = jax.devices()[0].device_kind.lower()
    except Exception:
        return 1
    for tag in ("v4", "v5p", "v7", "7x"):
        if tag in kind:
            return 2
    return 1


def _reduce_rows_to_8(x):
    """(R, 128) -> (8, 128) by a sublane-aligned binary fold (pure vreg adds)."""
    rows = x.shape[0]
    while rows > 8:
        half = rows // 2
        x = x[:half, :] + x[half:, :]
        rows = half
    return x


# ----------------------------------------------------------------------------
# Small path: everything fits in one block -> single-step whole-array kernel.
# ----------------------------------------------------------------------------
def _make_whole_kernel(num_pairs):
    def kernel(*refs):
        in_refs = refs[: 2 * num_pairs]
        out_ref = refs[2 * num_pairs]              # (1, num_pairs) SMEM
        for p in range(num_pairs):
            x = in_refs[2 * p][...].astype(jnp.float32)
            y = in_refs[2 * p + 1][...].astype(jnp.float32)
            d = x - y
            out_ref[0, p] = jnp.sum(d * d)
    return kernel


def _sse_whole(pairs):
    """Per-pair sum((x-y)^2) for pairs whose (rows,128) view fits one block."""
    num_pairs = len(pairs)
    flat = [a for pr in pairs for a in pr]
    in_specs = [pl.BlockSpec((int(a.shape[0]), _LANES), lambda i: (0, 0))
                for a in flat]
    out = pl.pallas_call(
        _make_whole_kernel(num_pairs),
        out_shape=jax.ShapeDtypeStruct((1, num_pairs), jnp.float32),
        grid=(1,),
        in_specs=in_specs,
        out_specs=pl.BlockSpec((1, num_pairs), lambda i: (0, 0),
                               memory_space=pltpu.SMEM),
        compiler_params=pltpu.CompilerParams(
            dimension_semantics=("arbitrary",),
            vmem_limit_bytes=_VMEM_LIMIT_BYTES),
    )(*flat)
    return out[0]


# ----------------------------------------------------------------------------
# Streaming path: large tensors, multi-block grid, (8,128) accumulators.
# ----------------------------------------------------------------------------
def _make_stream_kernel(num_pairs, rows_list, block_rows, steps_per_core,
                        covered_steps):
    blocks_list = [pl.cdiv(r, block_rows) for r in rows_list]

    def kernel(*refs):
        in_refs = refs[: 2 * num_pairs]
        out_ref = refs[2 * num_pairs]               # (1, num_pairs) SMEM
        acc_refs = refs[2 * num_pairs + 1:]          # num_pairs x (8,128) VMEM

        c = pl.program_id(0)
        i = pl.program_id(1)
        g = c * steps_per_core + i                   # global block index

        @pl.when(i == 0)
        def _():
            for acc in acc_refs:
                acc[...] = jnp.zeros_like(acc)

        for p in range(num_pairs):
            rows_p = rows_list[p]
            blocks_p = blocks_list[p]
            rem = rows_p - (blocks_p - 1) * block_rows     # rows in last block
            has_partial = rem != block_rows
            full_blocks = blocks_p - 1 if has_partial else blocks_p
            acc = acc_refs[p]
            x_ref = in_refs[2 * p]
            y_ref = in_refs[2 * p + 1]

            def sq_block(x_ref=x_ref, y_ref=y_ref):
                d = x_ref[...].astype(jnp.float32) - y_ref[...].astype(jnp.float32)
                return d * d

            def add_full(acc=acc, sq_block=sq_block):
                # Hot loop: sub, mul, log2 fold -- no masking, no big acc RMW.
                acc[...] += _reduce_rows_to_8(sq_block())

            def add_partial(acc=acc, sq_block=sq_block, rem=rem):
                # Only executed on the single partial step for this pair.
                sq = sq_block()
                ridx = lax.broadcasted_iota(jnp.int32, (block_rows, _LANES), 0)
                sq = jnp.where(ridx < rem, sq, 0.0)
                acc[...] += _reduce_rows_to_8(sq)

            if has_partial:
                if full_blocks > 0:
                    pl.when(g < full_blocks)(add_full)
                pl.when(g == blocks_p - 1)(add_partial)
            else:
                if covered_steps > blocks_p:
                    pl.when(g < blocks_p)(add_full)
                else:
                    add_full()

        @pl.when(i == steps_per_core - 1)
        def _():
            for p in range(num_pairs):
                out_ref[0, p] = jnp.sum(acc_refs[p][...])

    return kernel


def _sse_stream(pairs, rows_list):
    """Per-pair sum((x-y)^2) for pairs with rows > _MAX_BLOCK_ROWS (fused)."""
    num_pairs = len(pairs)
    block_rows = _MAX_BLOCK_ROWS
    blocks_list = [pl.cdiv(r, block_rows) for r in rows_list]
    total_blocks = max(blocks_list)

    n_splits = 2 if (_num_tensorcores() >= 2 and total_blocks >= 2) else 1
    steps_per_core = pl.cdiv(total_blocks, n_splits)
    covered_steps = n_splits * steps_per_core

    def make_in_spec(blocks_p):
        if covered_steps > blocks_p:
            def imap(c, i, _b=blocks_p):
                return (jnp.minimum(c * steps_per_core + i, _b - 1), 0)
        else:
            def imap(c, i):
                return (c * steps_per_core + i, 0)
        return pl.BlockSpec((block_rows, _LANES), imap)

    in_specs = []
    for p in range(num_pairs):
        spec = make_in_spec(blocks_list[p])
        in_specs += [spec, spec]

    flat = [a for pr in pairs for a in pr]
    n_elems = sum(rows_list) * _LANES
    in_bytes = sum(int(a.size) * a.dtype.itemsize for a in flat)
    cost = pl.CostEstimate(flops=3 * n_elems, transcendentals=0,
                           bytes_accessed=in_bytes + n_splits * num_pairs * 4)

    partial = pl.pallas_call(
        _make_stream_kernel(num_pairs, rows_list, block_rows,
                            steps_per_core, covered_steps),
        out_shape=jax.ShapeDtypeStruct((n_splits, num_pairs), jnp.float32),
        grid=(n_splits, steps_per_core),
        in_specs=in_specs,
        out_specs=pl.BlockSpec((1, num_pairs), lambda c, i: (c, 0),
                               memory_space=pltpu.SMEM),
        scratch_shapes=[pltpu.VMEM((8, _LANES), jnp.float32)
                        for _ in range(num_pairs)],
        compiler_params=pltpu.CompilerParams(
            dimension_semantics=("parallel", "arbitrary"),
            vmem_limit_bytes=_VMEM_LIMIT_BYTES),
        cost_estimate=cost,
    )(*flat)

    return jnp.sum(partial, axis=0)   # combine per-core partials -> (num_pairs,)


# ----------------------------------------------------------------------------
# Wrapper
# ----------------------------------------------------------------------------
def _prep_pair(x, y):
    """Flatten a pair into a lane-aligned (rows,128) main part + scalar tail SSE."""
    assert x.shape == y.shape, (x.shape, y.shape)
    n = int(x.size)
    xf = jnp.reshape(x, (-1,))
    yf = jnp.reshape(y, (-1,))
    tail = n % _LANES
    rows = n // _LANES

    if rows:
        # TODO(synk): when tail != 0 this prefix slice makes XLA materialize the
        # (rows*128,) main part as a separate HBM buffer (one extra pass); a
        # 1-D-block kernel that folds the tail into the last block would avoid it.
        xm = xf[: rows * _LANES] if tail else xf
        ym = yf[: rows * _LANES] if tail else yf
        x2 = jnp.reshape(xm, (rows, _LANES))
        y2 = jnp.reshape(ym, (rows, _LANES))
    else:
        x2 = y2 = None

    if tail:
        dt = xf[rows * _LANES:].astype(jnp.float32) - yf[rows * _LANES:].astype(jnp.float32)
        tail_sse = jnp.sum(dt * dt)
    else:
        tail_sse = jnp.float32(0.0)

    return x2, y2, rows, tail_sse, n


def feature_extractor_loss(k_pred, img_pred, k_target, img_target):
    """Mirrors FeatureExtractorLoss.forward(input[0..3])."""
    preps = [_prep_pair(k_pred, k_target), _prep_pair(img_pred, img_target)]
    sse = [p[3] for p in preps]   # start from the (<128 element) tail SSEs

    small = [i for i, p in enumerate(preps) if 0 < p[2] <= _MAX_BLOCK_ROWS]
    large = [i for i, p in enumerate(preps) if p[2] > _MAX_BLOCK_ROWS]

    if small:
        res = _sse_whole([(preps[i][0], preps[i][1]) for i in small])
        for j, i in enumerate(small):
            sse[i] = sse[i] + res[j]
    if large:
        res = _sse_stream([(preps[i][0], preps[i][1]) for i in large],
                          [preps[i][2] for i in large])
        for j, i in enumerate(large):
            sse[i] = sse[i] + res[j]

    return sse[0] / jnp.float32(preps[0][4]) + sse[1] / jnp.float32(preps[1][4])


if __name__ == "__main__":
    key = jax.random.PRNGKey(0)
    k0, k1, k2, k3 = jax.random.split(key, 4)

    # Primary check: small NCHW tensors (batch=2, channels=4, H=16, W=16).
    shape = (2, 4, 16, 16)
    k_pred = jax.random.normal(k0, shape, dtype=jnp.float32)
    img_pred = jax.random.normal(k1, shape, dtype=jnp.float32)
    k_target = jax.random.normal(k2, shape, dtype=jnp.float32)
    img_target = jax.random.normal(k3, shape, dtype=jnp.float32)

    loss_fn = jax.jit(feature_extractor_loss)
    loss = jax.block_until_ready(loss_fn(k_pred, img_pred, k_target, img_target))

    ref = jnp.mean((k_pred - k_target) ** 2) + jnp.mean((img_pred - img_target) ** 2)
    assert jnp.allclose(loss, ref, rtol=1e-5, atol=1e-6), (loss, ref)

    # Secondary self-check: exercises the streaming multi-block path
    # (unequal pair sizes, partial last blocks, ragged <128-element tail).
    kb_shape = (1, 2, 575, 513)    # 589,950 elems -> 4608 rows (2 blocks) + 126 tail
    ib_shape = (1, 1, 800, 768)    # 614,400 elems -> 4800 rows (2 blocks)
    kp = jax.random.normal(k0, kb_shape, dtype=jnp.float32)
    kt = jax.random.normal(k1, kb_shape, dtype=jnp.float32)
    ip_ = jax.random.normal(k2, ib_shape, dtype=jnp.float32)
    it = jax.random.normal(k3, ib_shape, dtype=jnp.float32)
    loss2 = jax.block_until_ready(jax.jit(feature_extractor_loss)(kp, ip_, kt, it))
    ref2 = jnp.mean((kp - kt) ** 2) + jnp.mean((ip_ - it) ** 2)
    assert jnp.allclose(loss2, ref2, rtol=1e-4, atol=1e-5), (loss2, ref2)

    print("KERNEL_OK")
</pallas_src>

<mosaic_0001>
module attributes {stable_mosaic.version = 11 : i64} {
  func.func @kernel(%arg0: i32, %arg1: memref<16x128xf32, #tpu.memory_space<vmem>>, %arg2: memref<16x128xf32, #tpu.memory_space<vmem>>, %arg3: memref<16x128xf32, #tpu.memory_space<vmem>>, %arg4: memref<16x128xf32, #tpu.memory_space<vmem>>, %arg5: memref<1x2xf32, #tpu.memory_space<smem>>) attributes {dimension_semantics = [#tpu.dimension_semantics<arbitrary>], iteration_bounds = array<i64: 1>, scalar_prefetch = 0 : i64, scratch_operands = 0 : i64, tpu.core_type = #tpu.core_type<tc>, window_params = [{pipeline_mode = #tpu.pipeline_mode<synchronous>, transform_indices = @transform_0, window_bounds = array<i64: 16, 128>}, {pipeline_mode = #tpu.pipeline_mode<synchronous>, transform_indices = @transform_1, window_bounds = array<i64: 16, 128>}, {pipeline_mode = #tpu.pipeline_mode<synchronous>, transform_indices = @transform_2, window_bounds = array<i64: 16, 128>}, {pipeline_mode = #tpu.pipeline_mode<synchronous>, transform_indices = @transform_3, window_bounds = array<i64: 16, 128>}, {transform_indices = @transform_4, window_bounds = array<i64: 1, 2>}]} {
    %c0 = arith.constant 0 : index
    %c0_0 = arith.constant 0 : index
    %0 = vector.load %arg1[%c0, %c0_0] : memref<16x128xf32, #tpu.memory_space<vmem>>, vector<16x128xf32>
    %c0_1 = arith.constant 0 : index
    %c0_2 = arith.constant 0 : index
    %1 = vector.load %arg2[%c0_1, %c0_2] : memref<16x128xf32, #tpu.memory_space<vmem>>, vector<16x128xf32>
    %2 = arith.subf %0, %1 : vector<16x128xf32>
    %3 = arith.mulf %2, %2 : vector<16x128xf32>
    %4 = vector.shape_cast %3 : vector<16x128xf32> to vector<1x16x128xf32>
    %cst = arith.constant dense<0.000000e+00> : vector<1xf32>
    %5 = vector.multi_reduction <add>, %4, %cst [1, 2] : vector<1x16x128xf32> to vector<1xf32>
    %6 = vector.shape_cast %5 : vector<1xf32> to vector<1x1x1xf32>
    %7 = vector.extract %6[0, 0, 0] : f32 from vector<1x1x1xf32>
    %c0_3 = arith.constant 0 : index
    %c0_4 = arith.constant 0 : index
    %8 = memref.load %arg5[%c0_3, %c0_4] : memref<1x2xf32, #tpu.memory_space<smem>>
    memref.store %7, %arg5[%c0_3, %c0_4] : memref<1x2xf32, #tpu.memory_space<smem>>
    %c0_5 = arith.constant 0 : index
    %c0_6 = arith.constant 0 : index
    %9 = vector.load %arg3[%c0_5, %c0_6] : memref<16x128xf32, #tpu.memory_space<vmem>>, vector<16x128xf32>
    %c0_7 = arith.constant 0 : index
    %c0_8 = arith.constant 0 : index
    %10 = vector.load %arg4[%c0_7, %c0_8] : memref<16x128xf32, #tpu.memory_space<vmem>>, vector<16x128xf32>
    %11 = arith.subf %9, %10 : vector<16x128xf32>
    %12 = arith.mulf %11, %11 : vector<16x128xf32>
    %13 = vector.shape_cast %12 : vector<16x128xf32> to vector<1x16x128xf32>
    %cst_9 = arith.constant dense<0.000000e+00> : vector<1xf32>
    %14 = vector.multi_reduction <add>, %13, %cst_9 [1, 2] : vector<1x16x128xf32> to vector<1xf32>
    %15 = vector.shape_cast %14 : vector<1xf32> to vector<1x1x1xf32>
    %16 = vector.extract %15[0, 0, 0] : f32 from vector<1x1x1xf32>
    %c0_10 = arith.constant 0 : index
    %c1 = arith.constant 1 : index
    %17 = memref.load %arg5[%c0_10, %c1] : memref<1x2xf32, #tpu.memory_space<smem>>
    memref.store %16, %arg5[%c0_10, %c1] : memref<1x2xf32, #tpu.memory_space<smem>>
    return
  }
  func.func @transform_0(%arg0: i32) -> (i32, i32) {
    %c0_i32 = arith.constant 0 : i32
    %c0_i32_0 = arith.constant 0 : i32
    %c0_i32_1 = arith.constant 0 : i32
    return %c0_i32, %c0_i32_0 : i32, i32
  }
  func.func @transform_1(%arg0: i32) -> (i32, i32) {
    %c0_i32 = arith.constant 0 : i32
    %c0_i32_0 = arith.constant 0 : i32
    %c0_i32_1 = arith.constant 0 : i32
    return %c0_i32, %c0_i32_0 : i32, i32
  }
  func.func @transform_2(%arg0: i32) -> (i32, i32) {
    %c0_i32 = arith.constant 0 : i32
    %c0_i32_0 = arith.constant 0 : i32
    %c0_i32_1 = arith.constant 0 : i32
    return %c0_i32, %c0_i32_0 : i32, i32
  }
  func.func @transform_3(%arg0: i32) -> (i32, i32) {
    %c0_i32 = arith.constant 0 : i32
    %c0_i32_0 = arith.constant 0 : i32
    %c0_i32_1 = arith.constant 0 : i32
    return %c0_i32, %c0_i32_0 : i32, i32
  }
  func.func @transform_4(%arg0: i32) -> (i32, i32) {
    %c0_i32 = arith.constant 0 : i32
    %c0_i32_0 = arith.constant 0 : i32
    %c0_i32_1 = arith.constant 0 : i32
    return %c0_i32, %c0_i32_0 : i32, i32
  }
}

</mosaic_0001>

<llo_original>
// kernel: feature_extractor_loss.1
$region0: #{feature_extractor_loss.1}
  #allocation0 [shape = 'u32[]', space=smem, size = 0x4, offset = 0x4, fixed_abs, tag = 'smem constant byte address 0x4 - core index']
  #allocation1 [shape = 'u32[144,128]{1,0:T(1,128)}', space=vmem, size = 0x12000, scoped, tag = 'internal scratch']
  %s0 = inlined_call_operand.vmem [shape: f32[16,128], index: 0, kind: input, shape index: {}]
  %s1 = inlined_call_operand.vmem [shape: f32[16,128], index: 1, kind: input, shape index: {}]
  %s2 = inlined_call_operand.vmem [shape: f32[16,128], index: 2, kind: input, shape index: {}]
  %s3 = inlined_call_operand.vmem [shape: f32[16,128], index: 3, kind: input, shape index: {}]
  %s4 = inlined_call_operand.vmem [shape: f32[1,2], index: 4, kind: output, shape index: {}]
  %s5 = sld [smem:[#allocation0]]
  $region26: #{feature_extractor_loss.1} parent=0
    _
  %s7 = ssub.s32 1, %s5
  %s8 = scalar_select 0, %s7, %s5
  $region1: #{feature_extractor_loss.1} parent=0
    #allocation2 [shape = 'u8[512]{0}', space=smem, size = 0x200, scoped, tag = 'output window, operand 0, single buffered']
    #allocation3 [shape = 's32[1]{0}', space=sflag, size = 0x4, scoped, tag = 'scoped memory for feature_extractor_loss.1']
    %9 = vsyncpa [#allocation3], 0
    // Predicated region
    $region2: #{feature_extractor_loss.1} parent=1 // pred_check
      _
    $region3: #{feature_extractor_loss.1} parent=1 // pred_check_branch
      %11 = sbr.rel (0) target = $region5
    $region4: #{feature_extractor_loss.1} parent=1 // pred_region
      _
    $region5: #{feature_extractor_loss.1} parent=1 // pred_fallthru
      _
    // Predicated region
    $region6: #{feature_extractor_loss.1} parent=1 // pred_check
      _
    $region7: #{feature_extractor_loss.1} parent=1 // pred_check_branch
      %13 = sbr.rel (0) target = $region9
    $region8: #{feature_extractor_loss.1} parent=1 // pred_region
      _
    $region9: #{feature_extractor_loss.1} parent=1 // pred_fallthru
      _
    // Predicated region
    $region10: #{feature_extractor_loss.1} parent=1 // pred_check
      _
    $region11: #{feature_extractor_loss.1} parent=1 // pred_check_branch
      %15 = sbr.rel (0) target = $region13
    $region12: #{feature_extractor_loss.1} parent=1 // pred_region
      _
    $region13: #{feature_extractor_loss.1} parent=1 // pred_fallthru
      _
    // Predicated region
    $region14: #{feature_extractor_loss.1} parent=1 // pred_check
      _
    $region15: #{feature_extractor_loss.1} parent=1 // pred_check_branch
      %17 = sbr.rel (0) target = $region17
    $region16: #{feature_extractor_loss.1} parent=1 // pred_region
      _
    $region17: #{feature_extractor_loss.1} parent=1 // pred_fallthru
      _
    %v18 = vld [vmem:[%s0] sm:$0xff]
    %v19 = vld [vmem:[%s0 + $0x8] sm:$0xff]
    %v20 = vld [vmem:[%s1] sm:$0xff]
    %v21 = vld [vmem:[%s1 + $0x8] sm:$0xff]
    %v22 = vsub.f32 %v18, %v20
    %v23 = vsub.f32 %v19, %v21
    %v24 = vmul.f32 %v22, %v22
    %v25 = vmul.f32 %v23, %v23
    %v26 = vadd.f32 %v24, %v25
    %27 = vadd.xlane.f32.xlu0 %v26
    %v28 = vpop.xlane.xlu0 %27
    %v29 = vrot.slane %v28, 4
    %v30 = vadd.f32 %v28, %v29
    %v31 = vrot.slane %v30, 2
    %v32 = vadd.f32 %v30, %v31
    %v33 = vrot.slane %v32, 1
    %v34 = vadd.f32 %v32, %v33
    %s35 = vtos %v34
    %s36 = scalar_lea.smem [#allocation2], 0
    %37 = sst [smem:[%s36]] %s35
    %v38 = vld [vmem:[%s2] sm:$0xff]
    %v39 = vld [vmem:[%s2 + $0x8] sm:$0xff]
    %v40 = vld [vmem:[%s3] sm:$0xff]
    %v41 = vld [vmem:[%s3 + $0x8] sm:$0xff]
    %v42 = vsub.f32 %v38, %v40
    %v43 = vsub.f32 %v39, %v41
    %v44 = vmul.f32 %v42, %v42
    %v45 = vmul.f32 %v43, %v43
    %v46 = vadd.f32 %v44, %v45
    %47 = vadd.xlane.f32.xlu0 %v46
    %v48 = vpop.xlane.xlu0 %47
    %v49 = vrot.slane %v48, 4
    %v50 = vadd.f32 %v48, %v49
    %v51 = vrot.slane %v50, 2
    %v52 = vadd.f32 %v50, %v51
    %v53 = vrot.slane %v52, 1
    %v54 = vadd.f32 %v52, %v53
    %s55 = vtos %v54
    %s56 = scalar_lea.smem [#allocation2], 1
    %57 = sst [smem:[%s56]] %s55
    // Predicated region
    $region18: #{feature_extractor_loss.1} parent=1 // pred_check
      _
    $region19: #{feature_extractor_loss.1} parent=1 // pred_check_branch
      %59 = sbr.rel (0) target = $region21
    $region20: #{feature_extractor_loss.1} parent=1 // pred_region
      %s61 = ssub.s32 16, 16
      %62 = vsyncadd [#allocation3], %s61
      %s64 = sshll.u32 %s4, 4
      %s65 = int_to_ptr.vmem [resolvable:$true] %s64
      %67 = dma.smem_to_vmem [#allocation2], 16, %s65, [#allocation3]
    $region21: #{feature_extractor_loss.1} parent=1 // pred_fallthru
      _
    // Predicated region
    $region22: #{feature_extractor_loss.1} parent=1 // pred_check
      _
    $region23: #{feature_extractor_loss.1} parent=1 // pred_check_branch
      %69 = sbr.rel (0) target = $region25
    $region24: #{feature_extractor_loss.1} parent=1 // pred_region
      %70 = dma.done [#allocation3], 16
    $region25: #{feature_extractor_loss.1} parent=1 // pred_fallthru
      _
    %71 = sfence
    %72 = vsyncpa [#allocation3], 1

</llo_original>
